<compile_context>
chip_gen: v7x
topology: tpu7x:2x2x1
jax: 0.10.0
libtpu: 0.0.40
codegen_flags: <defaults>
</compile_context>

<pallas_src>
import jax
import jax.numpy as jnp
from jax.experimental import pallas as pl
from jax.experimental.pallas import tpu as pltpu

FOLD = 8            # batch folds packed onto the sublane axis
LC = 1024           # lanes per chunk (points per fold per chunk)
CHUNK = FOLD * LC   # points per chunk = 8192
HID = 16            # fc1 output width


def _round_up(n, m):
    return ((n + m - 1) // m) * m


def _cdiv(n, m):
    return (n + m - 1) // m


def spirals_mlp_kernel(p_ref, x_ref, o_ref):
    """One grid block of `cb` chunks of 8192 points each.

    p_ref: (65,) f32 in SMEM: [ w1[:,0] | w1[:,1] | b1 | w4 | b4 ]
    x_ref: (cb, 16, LC) f32 in VMEM; rows 0..7 = feature-0 of the 8 batch
           folds, rows 8..15 = feature-1 of the 8 batch folds.
    o_ref: (cb, 8, LC) f32 in VMEM; row f = outputs of batch fold f.
    """
    cb = x_ref.shape[0]

    # Hoist the 65 parameters out of the chunk loop (SMEM scalar reads).
    w10 = [p_ref[j] for j in range(HID)]
    w11 = [p_ref[HID + j] for j in range(HID)]
    b1 = [p_ref[2 * HID + j] for j in range(HID)]
    w4 = [p_ref[3 * HID + j] for j in range(HID)]
    b4 = p_ref[4 * HID]

    def chunk_body(c, carry):
        xc = x_ref[c]                        # (16, LC) load
        x0 = xc[0:FOLD, :]                   # (8, LC) feature 0, 8 batch folds
        x1 = xc[FOLD:2 * FOLD, :]            # (8, LC) feature 1, 8 batch folds

        acc = jnp.zeros((FOLD, LC), dtype=jnp.float32)
        for j in range(HID):                 # unrolled over the 16 hidden units
            # Dense (8, LC) VPU ops with scalar-broadcast weights.
            h = jnp.maximum(x0 * w10[j] + x1 * w11[j] + b1[j], 0.0)
            acc = acc + h * w4[j]

        o_ref[c] = jax.nn.sigmoid(acc + b4)  # EUP sigmoid, dense (8, LC) store
        return carry

    jax.lax.fori_loop(0, cb, chunk_body, 0)


def spirals_mlp_forward(x, params, *, chunks_per_block=8):
    """x: (B, 2) float32 -> (B, 1) float32."""
    B = x.shape[0]

    nc = max(1, _cdiv(B, CHUNK))                 # total 8192-point chunks
    cb = max(1, min(chunks_per_block, nc))       # chunks per grid step
    nc = _round_up(nc, cb)
    b_pad = nc * CHUNK

    # Pack: point p -> (chunk p//8192, fold (p%8192)//1024, lane p%1024).
    x_pad = jnp.pad(x.astype(jnp.float32), ((0, b_pad - B), (0, 0)))
    xp = x_pad.reshape(nc, FOLD, LC, 2)
    xp = jnp.concatenate([xp[..., 0], xp[..., 1]], axis=1)     # (nc, 16, LC)

    # One packed parameter vector: w1 col0 | w1 col1 | b1 | w4 | b4  (65 f32).
    p_packed = jnp.concatenate([
        params["w1"][:, 0], params["w1"][:, 1],
        params["b1"], params["w4"][0], params["b4"],
    ]).astype(jnp.float32)

    op = pl.pallas_call(
        spirals_mlp_kernel,
        out_shape=jax.ShapeDtypeStruct((nc, FOLD, LC), jnp.float32),
        grid=(nc // cb,),
        in_specs=[
            pl.BlockSpec(memory_space=pltpu.MemorySpace.SMEM),       # params
            pl.BlockSpec((cb, 2 * FOLD, LC), lambda i: (i, 0, 0)),   # x chunks
        ],
        out_specs=pl.BlockSpec((cb, FOLD, LC), lambda i: (i, 0, 0)),
        compiler_params=pltpu.CompilerParams(
            dimension_semantics=("parallel",)),
    )(p_packed, xp)

    # Unpack: flat index = chunk*8192 + fold*1024 + lane = original point index.
    return op.reshape(b_pad, 1)[:B]


def init_params(key):
    """Deterministic synthetic parameters (nn.Linear-style uniform init)."""
    ks = jax.random.split(key, 4)
    bound1 = 1.0 / jnp.sqrt(2.0)         # fc1: in_features = 2
    bound4 = 1.0 / jnp.sqrt(16.0)        # fc4: in_features = 16
    u = lambda k, shape, bnd: jax.random.uniform(
        k, shape, dtype=jnp.float32, minval=-bnd, maxval=bnd)
    return {
        "w1": u(ks[0], (16, 2), bound1),   # PyTorch (out_features, in_features)
        "b1": u(ks[1], (16,), bound1),
        "w4": u(ks[2], (1, 16), bound4),
        "b4": u(ks[3], (1,), bound4),
    }


def reference_forward(x, p):
    """Pure-JAX reference: sigmoid(fc4(relu(fc1(x))))."""
    h = jax.nn.relu(x @ p["w1"].T + p["b1"])          # (B, 16)
    return jax.nn.sigmoid(h @ p["w4"].T + p["b4"])    # (B, 1)


if __name__ == "__main__":
    key = jax.random.PRNGKey(0)
    k_x, k_p = jax.random.split(key)
    params = init_params(k_p)

    # Small demo batch of 2-D spiral points.
    B = 8
    x = jax.random.normal(k_x, (B, 2), dtype=jnp.float32)
    out = jax.block_until_ready(spirals_mlp_forward(x, params))
    ref = reference_forward(x, params)
    assert out.shape == (B, 1)
    assert jnp.allclose(out, ref, atol=1e-5, rtol=1e-5), \
        float(jnp.max(jnp.abs(out - ref)))

    # A ragged multi-chunk batch: exercises the in-kernel chunk loop (cb=3)
    # and a multi-step pipelined grid (cb=1 -> 3 grid steps).
    B2 = 20000
    x2 = jax.random.normal(k_x, (B2, 2), dtype=jnp.float32)
    ref2 = reference_forward(x2, params)
    for cb in (8, 1):
        out2 = jax.block_until_ready(
            spirals_mlp_forward(x2, params, chunks_per_block=cb))
        assert out2.shape == (B2, 1)
        assert jnp.allclose(out2, ref2, atol=1e-5, rtol=1e-5), \
            float(jnp.max(jnp.abs(out2 - ref2)))

    print("KERNEL_OK")
</pallas_src>

<mosaic_0001>
module attributes {stable_mosaic.version = 11 : i64} {
  func.func @spirals_mlp_kernel(%arg0: i32, %arg1: memref<65xf32, #tpu.memory_space<smem>>, %arg2: memref<1x16x1024xf32, #tpu.memory_space<vmem>>, %arg3: memref<1x8x1024xf32, #tpu.memory_space<vmem>>) attributes {dimension_semantics = [#tpu.dimension_semantics<parallel>], iteration_bounds = array<i64: 1>, scalar_prefetch = 0 : i64, scratch_operands = 0 : i64, tpu.core_type = #tpu.core_type<tc>, window_params = [{transform_indices = @transform_0, window_bounds = array<i64: 65>}, {transform_indices = @transform_1, window_bounds = array<i64: 1, 16, 1024>}, {transform_indices = @transform_2, window_bounds = array<i64: 1, 8, 1024>}]} {
    %c0 = arith.constant 0 : index
    %0 = memref.load %arg1[%c0] : memref<65xf32, #tpu.memory_space<smem>>
    %c1 = arith.constant 1 : index
    %1 = memref.load %arg1[%c1] : memref<65xf32, #tpu.memory_space<smem>>
    %c2 = arith.constant 2 : index
    %2 = memref.load %arg1[%c2] : memref<65xf32, #tpu.memory_space<smem>>
    %c3 = arith.constant 3 : index
    %3 = memref.load %arg1[%c3] : memref<65xf32, #tpu.memory_space<smem>>
    %c4 = arith.constant 4 : index
    %4 = memref.load %arg1[%c4] : memref<65xf32, #tpu.memory_space<smem>>
    %c5 = arith.constant 5 : index
    %5 = memref.load %arg1[%c5] : memref<65xf32, #tpu.memory_space<smem>>
    %c6 = arith.constant 6 : index
    %6 = memref.load %arg1[%c6] : memref<65xf32, #tpu.memory_space<smem>>
    %c7 = arith.constant 7 : index
    %7 = memref.load %arg1[%c7] : memref<65xf32, #tpu.memory_space<smem>>
    %c8 = arith.constant 8 : index
    %8 = memref.load %arg1[%c8] : memref<65xf32, #tpu.memory_space<smem>>
    %c9 = arith.constant 9 : index
    %9 = memref.load %arg1[%c9] : memref<65xf32, #tpu.memory_space<smem>>
    %c10 = arith.constant 10 : index
    %10 = memref.load %arg1[%c10] : memref<65xf32, #tpu.memory_space<smem>>
    %c11 = arith.constant 11 : index
    %11 = memref.load %arg1[%c11] : memref<65xf32, #tpu.memory_space<smem>>
    %c12 = arith.constant 12 : index
    %12 = memref.load %arg1[%c12] : memref<65xf32, #tpu.memory_space<smem>>
    %c13 = arith.constant 13 : index
    %13 = memref.load %arg1[%c13] : memref<65xf32, #tpu.memory_space<smem>>
    %c14 = arith.constant 14 : index
    %14 = memref.load %arg1[%c14] : memref<65xf32, #tpu.memory_space<smem>>
    %c15 = arith.constant 15 : index
    %15 = memref.load %arg1[%c15] : memref<65xf32, #tpu.memory_space<smem>>
    %c16 = arith.constant 16 : index
    %16 = memref.load %arg1[%c16] : memref<65xf32, #tpu.memory_space<smem>>
    %c17 = arith.constant 17 : index
    %17 = memref.load %arg1[%c17] : memref<65xf32, #tpu.memory_space<smem>>
    %c18 = arith.constant 18 : index
    %18 = memref.load %arg1[%c18] : memref<65xf32, #tpu.memory_space<smem>>
    %c19 = arith.constant 19 : index
    %19 = memref.load %arg1[%c19] : memref<65xf32, #tpu.memory_space<smem>>
    %c20 = arith.constant 20 : index
    %20 = memref.load %arg1[%c20] : memref<65xf32, #tpu.memory_space<smem>>
    %c21 = arith.constant 21 : index
    %21 = memref.load %arg1[%c21] : memref<65xf32, #tpu.memory_space<smem>>
    %c22 = arith.constant 22 : index
    %22 = memref.load %arg1[%c22] : memref<65xf32, #tpu.memory_space<smem>>
    %c23 = arith.constant 23 : index
    %23 = memref.load %arg1[%c23] : memref<65xf32, #tpu.memory_space<smem>>
    %c24 = arith.constant 24 : index
    %24 = memref.load %arg1[%c24] : memref<65xf32, #tpu.memory_space<smem>>
    %c25 = arith.constant 25 : index
    %25 = memref.load %arg1[%c25] : memref<65xf32, #tpu.memory_space<smem>>
    %c26 = arith.constant 26 : index
    %26 = memref.load %arg1[%c26] : memref<65xf32, #tpu.memory_space<smem>>
    %c27 = arith.constant 27 : index
    %27 = memref.load %arg1[%c27] : memref<65xf32, #tpu.memory_space<smem>>
    %c28 = arith.constant 28 : index
    %28 = memref.load %arg1[%c28] : memref<65xf32, #tpu.memory_space<smem>>
    %c29 = arith.constant 29 : index
    %29 = memref.load %arg1[%c29] : memref<65xf32, #tpu.memory_space<smem>>
    %c30 = arith.constant 30 : index
    %30 = memref.load %arg1[%c30] : memref<65xf32, #tpu.memory_space<smem>>
    %c31 = arith.constant 31 : index
    %31 = memref.load %arg1[%c31] : memref<65xf32, #tpu.memory_space<smem>>
    %c32 = arith.constant 32 : index
    %32 = memref.load %arg1[%c32] : memref<65xf32, #tpu.memory_space<smem>>
    %c33 = arith.constant 33 : index
    %33 = memref.load %arg1[%c33] : memref<65xf32, #tpu.memory_space<smem>>
    %c34 = arith.constant 34 : index
    %34 = memref.load %arg1[%c34] : memref<65xf32, #tpu.memory_space<smem>>
    %c35 = arith.constant 35 : index
    %35 = memref.load %arg1[%c35] : memref<65xf32, #tpu.memory_space<smem>>
    %c36 = arith.constant 36 : index
    %36 = memref.load %arg1[%c36] : memref<65xf32, #tpu.memory_space<smem>>
    %c37 = arith.constant 37 : index
    %37 = memref.load %arg1[%c37] : memref<65xf32, #tpu.memory_space<smem>>
    %c38 = arith.constant 38 : index
    %38 = memref.load %arg1[%c38] : memref<65xf32, #tpu.memory_space<smem>>
    %c39 = arith.constant 39 : index
    %39 = memref.load %arg1[%c39] : memref<65xf32, #tpu.memory_space<smem>>
    %c40 = arith.constant 40 : index
    %40 = memref.load %arg1[%c40] : memref<65xf32, #tpu.memory_space<smem>>
    %c41 = arith.constant 41 : index
    %41 = memref.load %arg1[%c41] : memref<65xf32, #tpu.memory_space<smem>>
    %c42 = arith.constant 42 : index
    %42 = memref.load %arg1[%c42] : memref<65xf32, #tpu.memory_space<smem>>
    %c43 = arith.constant 43 : index
    %43 = memref.load %arg1[%c43] : memref<65xf32, #tpu.memory_space<smem>>
    %c44 = arith.constant 44 : index
    %44 = memref.load %arg1[%c44] : memref<65xf32, #tpu.memory_space<smem>>
    %c45 = arith.constant 45 : index
    %45 = memref.load %arg1[%c45] : memref<65xf32, #tpu.memory_space<smem>>
    %c46 = arith.constant 46 : index
    %46 = memref.load %arg1[%c46] : memref<65xf32, #tpu.memory_space<smem>>
    %c47 = arith.constant 47 : index
    %47 = memref.load %arg1[%c47] : memref<65xf32, #tpu.memory_space<smem>>
    %c48 = arith.constant 48 : index
    %48 = memref.load %arg1[%c48] : memref<65xf32, #tpu.memory_space<smem>>
    %c49 = arith.constant 49 : index
    %49 = memref.load %arg1[%c49] : memref<65xf32, #tpu.memory_space<smem>>
    %c50 = arith.constant 50 : index
    %50 = memref.load %arg1[%c50] : memref<65xf32, #tpu.memory_space<smem>>
    %c51 = arith.constant 51 : index
    %51 = memref.load %arg1[%c51] : memref<65xf32, #tpu.memory_space<smem>>
    %c52 = arith.constant 52 : index
    %52 = memref.load %arg1[%c52] : memref<65xf32, #tpu.memory_space<smem>>
    %c53 = arith.constant 53 : index
    %53 = memref.load %arg1[%c53] : memref<65xf32, #tpu.memory_space<smem>>
    %c54 = arith.constant 54 : index
    %54 = memref.load %arg1[%c54] : memref<65xf32, #tpu.memory_space<smem>>
    %c55 = arith.constant 55 : index
    %55 = memref.load %arg1[%c55] : memref<65xf32, #tpu.memory_space<smem>>
    %c56 = arith.constant 56 : index
    %56 = memref.load %arg1[%c56] : memref<65xf32, #tpu.memory_space<smem>>
    %c57 = arith.constant 57 : index
    %57 = memref.load %arg1[%c57] : memref<65xf32, #tpu.memory_space<smem>>
    %c58 = arith.constant 58 : index
    %58 = memref.load %arg1[%c58] : memref<65xf32, #tpu.memory_space<smem>>
    %c59 = arith.constant 59 : index
    %59 = memref.load %arg1[%c59] : memref<65xf32, #tpu.memory_space<smem>>
    %c60 = arith.constant 60 : index
    %60 = memref.load %arg1[%c60] : memref<65xf32, #tpu.memory_space<smem>>
    %c61 = arith.constant 61 : index
    %61 = memref.load %arg1[%c61] : memref<65xf32, #tpu.memory_space<smem>>
    %c62 = arith.constant 62 : index
    %62 = memref.load %arg1[%c62] : memref<65xf32, #tpu.memory_space<smem>>
    %c63 = arith.constant 63 : index
    %63 = memref.load %arg1[%c63] : memref<65xf32, #tpu.memory_space<smem>>
    %c64 = arith.constant 64 : index
    %64 = memref.load %arg1[%c64] : memref<65xf32, #tpu.memory_space<smem>>
    %c0_i32 = arith.constant 0 : i32
    %65 = arith.index_cast %c0_i32 : i32 to index
    %c0_0 = arith.constant 0 : index
    %c0_1 = arith.constant 0 : index
    %66 = vector.load %arg2[%65, %c0_0, %c0_1] : memref<1x16x1024xf32, #tpu.memory_space<vmem>>, vector<1x16x1024xf32>
    %67 = vector.shape_cast %66 : vector<1x16x1024xf32> to vector<16x1024xf32>
    %68 = vector.extract_strided_slice %67 {offsets = [0, 0], sizes = [8, 1024], strides = [1, 1]} : vector<16x1024xf32> to vector<8x1024xf32>
    %69 = vector.extract_strided_slice %67 {offsets = [8, 0], sizes = [8, 1024], strides = [1, 1]} : vector<16x1024xf32> to vector<8x1024xf32>
    %cst = arith.constant 0.000000e+00 : f32
    %70 = vector.broadcast %cst : f32 to vector<8x1024xf32>
    %71 = vector.broadcast %0 : f32 to vector<8x1024xf32>
    %72 = arith.mulf %68, %71 : vector<8x1024xf32>
    %73 = vector.broadcast %16 : f32 to vector<8x1024xf32>
    %74 = arith.mulf %69, %73 : vector<8x1024xf32>
    %75 = arith.addf %72, %74 : vector<8x1024xf32>
    %76 = vector.broadcast %32 : f32 to vector<8x1024xf32>
    %77 = arith.addf %75, %76 : vector<8x1024xf32>
    %cst_2 = arith.constant 0.000000e+00 : f32
    %78 = vector.broadcast %cst_2 : f32 to vector<8x1024xf32>
    %79 = arith.maximumf %77, %78 : vector<8x1024xf32>
    %80 = vector.broadcast %48 : f32 to vector<8x1024xf32>
    %81 = arith.mulf %79, %80 : vector<8x1024xf32>
    %82 = arith.addf %70, %81 : vector<8x1024xf32>
    %83 = vector.broadcast %1 : f32 to vector<8x1024xf32>
    %84 = arith.mulf %68, %83 : vector<8x1024xf32>
    %85 = vector.broadcast %17 : f32 to vector<8x1024xf32>
    %86 = arith.mulf %69, %85 : vector<8x1024xf32>
    %87 = arith.addf %84, %86 : vector<8x1024xf32>
    %88 = vector.broadcast %33 : f32 to vector<8x1024xf32>
    %89 = arith.addf %87, %88 : vector<8x1024xf32>
    %cst_3 = arith.constant 0.000000e+00 : f32
    %90 = vector.broadcast %cst_3 : f32 to vector<8x1024xf32>
    %91 = arith.maximumf %89, %90 : vector<8x1024xf32>
    %92 = vector.broadcast %49 : f32 to vector<8x1024xf32>
    %93 = arith.mulf %91, %92 : vector<8x1024xf32>
    %94 = arith.addf %82, %93 : vector<8x1024xf32>
    %95 = vector.broadcast %2 : f32 to vector<8x1024xf32>
    %96 = arith.mulf %68, %95 : vector<8x1024xf32>
    %97 = vector.broadcast %18 : f32 to vector<8x1024xf32>
    %98 = arith.mulf %69, %97 : vector<8x1024xf32>
    %99 = arith.addf %96, %98 : vector<8x1024xf32>
    %100 = vector.broadcast %34 : f32 to vector<8x1024xf32>
    %101 = arith.addf %99, %100 : vector<8x1024xf32>
    %cst_4 = arith.constant 0.000000e+00 : f32
    %102 = vector.broadcast %cst_4 : f32 to vector<8x1024xf32>
    %103 = arith.maximumf %101, %102 : vector<8x1024xf32>
    %104 = vector.broadcast %50 : f32 to vector<8x1024xf32>
    %105 = arith.mulf %103, %104 : vector<8x1024xf32>
    %106 = arith.addf %94, %105 : vector<8x1024xf32>
    %107 = vector.broadcast %3 : f32 to vector<8x1024xf32>
    %108 = arith.mulf %68, %107 : vector<8x1024xf32>
    %109 = vector.broadcast %19 : f32 to vector<8x1024xf32>
    %110 = arith.mulf %69, %109 : vector<8x1024xf32>
    %111 = arith.addf %108, %110 : vector<8x1024xf32>
    %112 = vector.broadcast %35 : f32 to vector<8x1024xf32>
    %113 = arith.addf %111, %112 : vector<8x1024xf32>
    %cst_5 = arith.constant 0.000000e+00 : f32
    %114 = vector.broadcast %cst_5 : f32 to vector<8x1024xf32>
    %115 = arith.maximumf %113, %114 : vector<8x1024xf32>
    %116 = vector.broadcast %51 : f32 to vector<8x1024xf32>
    %117 = arith.mulf %115, %116 : vector<8x1024xf32>
    %118 = arith.addf %106, %117 : vector<8x1024xf32>
    %119 = vector.broadcast %4 : f32 to vector<8x1024xf32>
    %120 = arith.mulf %68, %119 : vector<8x1024xf32>
    %121 = vector.broadcast %20 : f32 to vector<8x1024xf32>
    %122 = arith.mulf %69, %121 : vector<8x1024xf32>
    %123 = arith.addf %120, %122 : vector<8x1024xf32>
    %124 = vector.broadcast %36 : f32 to vector<8x1024xf32>
    %125 = arith.addf %123, %124 : vector<8x1024xf32>
    %cst_6 = arith.constant 0.000000e+00 : f32
    %126 = vector.broadcast %cst_6 : f32 to vector<8x1024xf32>
    %127 = arith.maximumf %125, %126 : vector<8x1024xf32>
    %128 = vector.broadcast %52 : f32 to vector<8x1024xf32>
    %129 = arith.mulf %127, %128 : vector<8x1024xf32>
    %130 = arith.addf %118, %129 : vector<8x1024xf32>
    %131 = vector.broadcast %5 : f32 to vector<8x1024xf32>
    %132 = arith.mulf %68, %131 : vector<8x1024xf32>
    %133 = vector.broadcast %21 : f32 to vector<8x1024xf32>
    %134 = arith.mulf %69, %133 : vector<8x1024xf32>
    %135 = arith.addf %132, %134 : vector<8x1024xf32>
    %136 = vector.broadcast %37 : f32 to vector<8x1024xf32>
    %137 = arith.addf %135, %136 : vector<8x1024xf32>
    %cst_7 = arith.constant 0.000000e+00 : f32
    %138 = vector.broadcast %cst_7 : f32 to vector<8x1024xf32>
    %139 = arith.maximumf %137, %138 : vector<8x1024xf32>
    %140 = vector.broadcast %53 : f32 to vector<8x1024xf32>
    %141 = arith.mulf %139, %140 : vector<8x1024xf32>
    %142 = arith.addf %130, %141 : vector<8x1024xf32>
    %143 = vector.broadcast %6 : f32 to vector<8x1024xf32>
    %144 = arith.mulf %68, %143 : vector<8x1024xf32>
    %145 = vector.broadcast %22 : f32 to vector<8x1024xf32>
    %146 = arith.mulf %69, %145 : vector<8x1024xf32>
    %147 = arith.addf %144, %146 : vector<8x1024xf32>
    %148 = vector.broadcast %38 : f32 to vector<8x1024xf32>
    %149 = arith.addf %147, %148 : vector<8x1024xf32>
    %cst_8 = arith.constant 0.000000e+00 : f32
    %150 = vector.broadcast %cst_8 : f32 to vector<8x1024xf32>
    %151 = arith.maximumf %149, %150 : vector<8x1024xf32>
    %152 = vector.broadcast %54 : f32 to vector<8x1024xf32>
    %153 = arith.mulf %151, %152 : vector<8x1024xf32>
    %154 = arith.addf %142, %153 : vector<8x1024xf32>
    %155 = vector.broadcast %7 : f32 to vector<8x1024xf32>
    %156 = arith.mulf %68, %155 : vector<8x1024xf32>
    %157 = vector.broadcast %23 : f32 to vector<8x1024xf32>
    %158 = arith.mulf %69, %157 : vector<8x1024xf32>
    %159 = arith.addf %156, %158 : vector<8x1024xf32>
    %160 = vector.broadcast %39 : f32 to vector<8x1024xf32>
    %161 = arith.addf %159, %160 : vector<8x1024xf32>
    %cst_9 = arith.constant 0.000000e+00 : f32
    %162 = vector.broadcast %cst_9 : f32 to vector<8x1024xf32>
    %163 = arith.maximumf %161, %162 : vector<8x1024xf32>
    %164 = vector.broadcast %55 : f32 to vector<8x1024xf32>
    %165 = arith.mulf %163, %164 : vector<8x1024xf32>
    %166 = arith.addf %154, %165 : vector<8x1024xf32>
    %167 = vector.broadcast %8 : f32 to vector<8x1024xf32>
    %168 = arith.mulf %68, %167 : vector<8x1024xf32>
    %169 = vector.broadcast %24 : f32 to vector<8x1024xf32>
    %170 = arith.mulf %69, %169 : vector<8x1024xf32>
    %171 = arith.addf %168, %170 : vector<8x1024xf32>
    %172 = vector.broadcast %40 : f32 to vector<8x1024xf32>
    %173 = arith.addf %171, %172 : vector<8x1024xf32>
    %cst_10 = arith.constant 0.000000e+00 : f32
    %174 = vector.broadcast %cst_10 : f32 to vector<8x1024xf32>
    %175 = arith.maximumf %173, %174 : vector<8x1024xf32>
    %176 = vector.broadcast %56 : f32 to vector<8x1024xf32>
    %177 = arith.mulf %175, %176 : vector<8x1024xf32>
    %178 = arith.addf %166, %177 : vector<8x1024xf32>
    %179 = vector.broadcast %9 : f32 to vector<8x1024xf32>
    %180 = arith.mulf %68, %179 : vector<8x1024xf32>
    %181 = vector.broadcast %25 : f32 to vector<8x1024xf32>
    %182 = arith.mulf %69, %181 : vector<8x1024xf32>
    %183 = arith.addf %180, %182 : vector<8x1024xf32>
    %184 = vector.broadcast %41 : f32 to vector<8x1024xf32>
    %185 = arith.addf %183, %184 : vector<8x1024xf32>
    %cst_11 = arith.constant 0.000000e+00 : f32
    %186 = vector.broadcast %cst_11 : f32 to vector<8x1024xf32>
    %187 = arith.maximumf %185, %186 : vector<8x1024xf32>
    %188 = vector.broadcast %57 : f32 to vector<8x1024xf32>
    %189 = arith.mulf %187, %188 : vector<8x1024xf32>
    %190 = arith.addf %178, %189 : vector<8x1024xf32>
    %191 = vector.broadcast %10 : f32 to vector<8x1024xf32>
    %192 = arith.mulf %68, %191 : vector<8x1024xf32>
    %193 = vector.broadcast %26 : f32 to vector<8x1024xf32>
    %194 = arith.mulf %69, %193 : vector<8x1024xf32>
    %195 = arith.addf %192, %194 : vector<8x1024xf32>
    %196 = vector.broadcast %42 : f32 to vector<8x1024xf32>
    %197 = arith.addf %195, %196 : vector<8x1024xf32>
    %cst_12 = arith.constant 0.000000e+00 : f32
    %198 = vector.broadcast %cst_12 : f32 to vector<8x1024xf32>
    %199 = arith.maximumf %197, %198 : vector<8x1024xf32>
    %200 = vector.broadcast %58 : f32 to vector<8x1024xf32>
    %201 = arith.mulf %199, %200 : vector<8x1024xf32>
    %202 = arith.addf %190, %201 : vector<8x1024xf32>
    %203 = vector.broadcast %11 : f32 to vector<8x1024xf32>
    %204 = arith.mulf %68, %203 : vector<8x1024xf32>
    %205 = vector.broadcast %27 : f32 to vector<8x1024xf32>
    %206 = arith.mulf %69, %205 : vector<8x1024xf32>
    %207 = arith.addf %204, %206 : vector<8x1024xf32>
    %208 = vector.broadcast %43 : f32 to vector<8x1024xf32>
    %209 = arith.addf %207, %208 : vector<8x1024xf32>
    %cst_13 = arith.constant 0.000000e+00 : f32
    %210 = vector.broadcast %cst_13 : f32 to vector<8x1024xf32>
    %211 = arith.maximumf %209, %210 : vector<8x1024xf32>
    %212 = vector.broadcast %59 : f32 to vector<8x1024xf32>
    %213 = arith.mulf %211, %212 : vector<8x1024xf32>
    %214 = arith.addf %202, %213 : vector<8x1024xf32>
    %215 = vector.broadcast %12 : f32 to vector<8x1024xf32>
    %216 = arith.mulf %68, %215 : vector<8x1024xf32>
    %217 = vector.broadcast %28 : f32 to vector<8x1024xf32>
    %218 = arith.mulf %69, %217 : vector<8x1024xf32>
    %219 = arith.addf %216, %218 : vector<8x1024xf32>
    %220 = vector.broadcast %44 : f32 to vector<8x1024xf32>
    %221 = arith.addf %219, %220 : vector<8x1024xf32>
    %cst_14 = arith.constant 0.000000e+00 : f32
    %222 = vector.broadcast %cst_14 : f32 to vector<8x1024xf32>
    %223 = arith.maximumf %221, %222 : vector<8x1024xf32>
    %224 = vector.broadcast %60 : f32 to vector<8x1024xf32>
    %225 = arith.mulf %223, %224 : vector<8x1024xf32>
    %226 = arith.addf %214, %225 : vector<8x1024xf32>
    %227 = vector.broadcast %13 : f32 to vector<8x1024xf32>
    %228 = arith.mulf %68, %227 : vector<8x1024xf32>
    %229 = vector.broadcast %29 : f32 to vector<8x1024xf32>
    %230 = arith.mulf %69, %229 : vector<8x1024xf32>
    %231 = arith.addf %228, %230 : vector<8x1024xf32>
    %232 = vector.broadcast %45 : f32 to vector<8x1024xf32>
    %233 = arith.addf %231, %232 : vector<8x1024xf32>
    %cst_15 = arith.constant 0.000000e+00 : f32
    %234 = vector.broadcast %cst_15 : f32 to vector<8x1024xf32>
    %235 = arith.maximumf %233, %234 : vector<8x1024xf32>
    %236 = vector.broadcast %61 : f32 to vector<8x1024xf32>
    %237 = arith.mulf %235, %236 : vector<8x1024xf32>
    %238 = arith.addf %226, %237 : vector<8x1024xf32>
    %239 = vector.broadcast %14 : f32 to vector<8x1024xf32>
    %240 = arith.mulf %68, %239 : vector<8x1024xf32>
    %241 = vector.broadcast %30 : f32 to vector<8x1024xf32>
    %242 = arith.mulf %69, %241 : vector<8x1024xf32>
    %243 = arith.addf %240, %242 : vector<8x1024xf32>
    %244 = vector.broadcast %46 : f32 to vector<8x1024xf32>
    %245 = arith.addf %243, %244 : vector<8x1024xf32>
    %cst_16 = arith.constant 0.000000e+00 : f32
    %246 = vector.broadcast %cst_16 : f32 to vector<8x1024xf32>
    %247 = arith.maximumf %245, %246 : vector<8x1024xf32>
    %248 = vector.broadcast %62 : f32 to vector<8x1024xf32>
    %249 = arith.mulf %247, %248 : vector<8x1024xf32>
    %250 = arith.addf %238, %249 : vector<8x1024xf32>
    %251 = vector.broadcast %15 : f32 to vector<8x1024xf32>
    %252 = arith.mulf %68, %251 : vector<8x1024xf32>
    %253 = vector.broadcast %31 : f32 to vector<8x1024xf32>
    %254 = arith.mulf %69, %253 : vector<8x1024xf32>
    %255 = arith.addf %252, %254 : vector<8x1024xf32>
    %256 = vector.broadcast %47 : f32 to vector<8x1024xf32>
    %257 = arith.addf %255, %256 : vector<8x1024xf32>
    %cst_17 = arith.constant 0.000000e+00 : f32
    %258 = vector.broadcast %cst_17 : f32 to vector<8x1024xf32>
    %259 = arith.maximumf %257, %258 : vector<8x1024xf32>
    %260 = vector.broadcast %63 : f32 to vector<8x1024xf32>
    %261 = arith.mulf %259, %260 : vector<8x1024xf32>
    %262 = arith.addf %250, %261 : vector<8x1024xf32>
    %263 = vector.broadcast %64 : f32 to vector<8x1024xf32>
    %264 = arith.addf %262, %263 : vector<8x1024xf32>
    %265 = arith.negf %264 : vector<8x1024xf32>
    %266 = math.exp %265 : vector<8x1024xf32>
    %cst_18 = arith.constant 1.000000e+00 : f32
    %267 = vector.broadcast %cst_18 : f32 to vector<8x1024xf32>
    %268 = arith.addf %267, %266 : vector<8x1024xf32>
    %269 = arith.divf %267, %268 : vector<8x1024xf32>
    %270 = arith.index_cast %c0_i32 : i32 to index
    %c0_19 = arith.constant 0 : index
    %c0_20 = arith.constant 0 : index
    %271 = vector.load %arg3[%270, %c0_19, %c0_20] : memref<1x8x1024xf32, #tpu.memory_space<vmem>>, vector<1x8x1024xf32>
    %272 = vector.shape_cast %271 : vector<1x8x1024xf32> to vector<8x1024xf32>
    %273 = vector.shape_cast %269 : vector<8x1024xf32> to vector<1x8x1024xf32>
    tpu.vector_store %arg3[%270, %c0_19, %c0_20], %273 {strides = array<i32>} : memref<1x8x1024xf32, #tpu.memory_space<vmem>>, vector<1x8x1024xf32>,
    %c1_i32 = arith.constant 1 : i32
    return
  }
  func.func @transform_0(%arg0: i32) -> i32 {
    %c0_i32 = arith.constant 0 : i32
    %c0_i32_0 = arith.constant 0 : i32
    return %c0_i32 : i32
  }
  func.func @transform_1(%arg0: i32) -> (i32, i32, i32) {
    %c0_i32 = arith.constant 0 : i32
    %c0_i32_0 = arith.constant 0 : i32
    %c0_i32_1 = arith.constant 0 : i32
    return %arg0, %c0_i32, %c0_i32_0 : i32, i32, i32
  }
  func.func @transform_2(%arg0: i32) -> (i32, i32, i32) {
    %c0_i32 = arith.constant 0 : i32
    %c0_i32_0 = arith.constant 0 : i32
    %c0_i32_1 = arith.constant 0 : i32
    return %arg0, %c0_i32, %c0_i32_0 : i32, i32, i32
  }
}

</mosaic_0001>

<llo_original>
// kernel: tpu_custom_call.1
$region0: #{tpu_custom_call.1}
  #allocation0 [shape = 'u32[]', space=smem, size = 0x4, offset = 0x4, fixed_abs, tag = 'smem constant byte address 0x4 - core index']
  #allocation1 [shape = 'u32[144,128]{1,0:T(1,128)}', space=vmem, size = 0x12000, scoped, tag = 'internal scratch']
  %s0 = inlined_call_operand.hbm [shape: f32[65], index: 0, kind: input, shape index: {}]
  %s1 = inlined_call_operand.hbm [shape: f32[1,16,1024], index: 1, kind: input, shape index: {}]
  %s2 = inlined_call_operand.hbm [shape: f32[1,8,1024], index: 2, kind: output, shape index: {}]
  %s3 = sld [smem:[#allocation0]]
  $region26: #{tpu_custom_call.1} parent=0
    _
  %s5 = ssub.s32 1, %s3
  %s6 = scalar_select 0, %s5, %s3
  $region1: #{tpu_custom_call.1} parent=0
    #allocation2 [shape = 'u8[512]{0}', space=smem, size = 0x200, scoped, tag = 'input window, operand 0, single buffered']
    #allocation3 [shape = 's32[1]{0}', space=sflag, size = 0x4, scoped, tag = 'scoped memory for tpu_custom_call.1']
    #allocation4 [shape = 's32[1]{0}', space=sflag, size = 0x4, scoped, tag = 'scoped memory for tpu_custom_call.1']
    #allocation5 [shape = 's32[1]{0}', space=sflag, size = 0x4, scoped, tag = 'scoped memory for tpu_custom_call.1']
    #allocation6 [shape = 'u8[65536]{0}', space=vmem, size = 0x10000, scoped, tag = 'input window, operand 1, single buffered']
    #allocation7 [shape = 'u8[32768]{0}', space=vmem, size = 0x8000, scoped, tag = 'output window, operand 0, single buffered']
    %7 = vsyncpa [#allocation5], 0
    %8 = vsyncpa [#allocation3], 0
    %9 = vsyncpa [#allocation4], 0
    // Predicated region
    $region2: #{tpu_custom_call.1} parent=1 // pred_check
      _
    $region3: #{tpu_custom_call.1} parent=1 // pred_check_branch
      %11 = sbr.rel (0) target = $region5
    $region4: #{tpu_custom_call.1} parent=1 // pred_region
      %s13 = ssub.s32 16, 16
      %14 = vsyncadd [#allocation5], %s13
      %17 = dma.hbm_to_smem %s0, 16, [#allocation2], [#allocation5]
    $region5: #{tpu_custom_call.1} parent=1 // pred_fallthru
      _
    // Predicated region
    $region6: #{tpu_custom_call.1} parent=1 // pred_check
      _
    $region7: #{tpu_custom_call.1} parent=1 // pred_check_branch
      %19 = sbr.rel (0) target = $region9
    $region8: #{tpu_custom_call.1} parent=1 // pred_region
      %s21 = ssub.s32 2048, 2048
      %22 = vsyncadd [#allocation3], %s21
      %s23 = sshll.u32 [#allocation6], 4
      %s24 = int_to_ptr.vmem [resolvable:$true] %s23
      %29 = dma.hbm_to_vmem [thread:$0]  %s1, 2048, %s24, [#allocation3], 1024, 1024, 64
    $region9: #{tpu_custom_call.1} parent=1 // pred_fallthru
      _
    // Predicated region
    $region10: #{tpu_custom_call.1} parent=1 // pred_check
      _
    $region11: #{tpu_custom_call.1} parent=1 // pred_check_branch
      %31 = sbr.rel (0) target = $region13
    $region12: #{tpu_custom_call.1} parent=1 // pred_region
      %32 = dma.done [#allocation5], 16
    $region13: #{tpu_custom_call.1} parent=1 // pred_fallthru
      _
    // Predicated region
    $region14: #{tpu_custom_call.1} parent=1 // pred_check
      _
    $region15: #{tpu_custom_call.1} parent=1 // pred_check_branch
      %34 = sbr.rel (0) target = $region17
    $region16: #{tpu_custom_call.1} parent=1 // pred_region
      %35 = dma.done [#allocation3], 2048
    $region17: #{tpu_custom_call.1} parent=1 // pred_fallthru
      _
    %36 = sfence
    %s37 = sld [smem:[#allocation2]]
    %s38 = sld [smem:[#allocation2 + $0x1]]
    %s39 = sld [smem:[#allocation2 + $0x2]]
    %s40 = sld [smem:[#allocation2 + $0x3]]
    %s41 = sld [smem:[#allocation2 + $0x4]]
    %s42 = sld [smem:[#allocation2 + $0x5]]
    %s43 = sld [smem:[#allocation2 + $0x6]]
    %s44 = sld [smem:[#allocation2 + $0x7]]
    %s45 = sld [smem:[#allocation2 + $0x8]]
    %s46 = sld [smem:[#allocation2 + $0x9]]
    %s47 = sld [smem:[#allocation2 + $0xa]]
    %s48 = sld [smem:[#allocation2 + $0xb]]
    %s49 = sld [smem:[#allocation2 + $0xc]]
    %s50 = sld [smem:[#allocation2 + $0xd]]
    %s51 = sld [smem:[#allocation2 + $0xe]]
    %s52 = sld [smem:[#allocation2 + $0xf]]
    %s53 = sld [smem:[#allocation2 + $0x10]]
    %s54 = sld [smem:[#allocation2 + $0x11]]
    %s55 = sld [smem:[#allocation2 + $0x12]]
    %s56 = sld [smem:[#allocation2 + $0x13]]
    %s57 = sld [smem:[#allocation2 + $0x14]]
    %s58 = sld [smem:[#allocation2 + $0x15]]
    %s59 = sld [smem:[#allocation2 + $0x16]]
    %s60 = sld [smem:[#allocation2 + $0x17]]
    %s61 = sld [smem:[#allocation2 + $0x18]]
    %s62 = sld [smem:[#allocation2 + $0x19]]
    %s63 = sld [smem:[#allocation2 + $0x1a]]
    %s64 = sld [smem:[#allocation2 + $0x1b]]
    %s65 = sld [smem:[#allocation2 + $0x1c]]
    %s66 = sld [smem:[#allocation2 + $0x1d]]
    %s67 = sld [smem:[#allocation2 + $0x1e]]
    %s68 = sld [smem:[#allocation2 + $0x1f]]
    %s69 = sld [smem:[#allocation2 + $0x20]]
    %s70 = sld [smem:[#allocation2 + $0x21]]
    %s71 = sld [smem:[#allocation2 + $0x22]]
    %s72 = sld [smem:[#allocation2 + $0x23]]
    %s73 = sld [smem:[#allocation2 + $0x24]]
    %s74 = sld [smem:[#allocation2 + $0x25]]
    %s75 = sld [smem:[#allocation2 + $0x26]]
    %s76 = sld [smem:[#allocation2 + $0x27]]
    %s77 = sld [smem:[#allocation2 + $0x28]]
    %s78 = sld [smem:[#allocation2 + $0x29]]
    %s79 = sld [smem:[#allocation2 + $0x2a]]
    %s80 = sld [smem:[#allocation2 + $0x2b]]
    %s81 = sld [smem:[#allocation2 + $0x2c]]
    %s82 = sld [smem:[#allocation2 + $0x2d]]
    %s83 = sld [smem:[#allocation2 + $0x2e]]
    %s84 = sld [smem:[#allocation2 + $0x2f]]
    %s85 = sld [smem:[#allocation2 + $0x30]]
    %s86 = sld [smem:[#allocation2 + $0x31]]
    %s87 = sld [smem:[#allocation2 + $0x32]]
    %s88 = sld [smem:[#allocation2 + $0x33]]
    %s89 = sld [smem:[#allocation2 + $0x34]]
    %s90 = sld [smem:[#allocation2 + $0x35]]
    %s91 = sld [smem:[#allocation2 + $0x36]]
    %s92 = sld [smem:[#allocation2 + $0x37]]
    %s93 = sld [smem:[#allocation2 + $0x38]]
    %s94 = sld [smem:[#allocation2 + $0x39]]
    %s95 = sld [smem:[#allocation2 + $0x3a]]
    %s96 = sld [smem:[#allocation2 + $0x3b]]
    %s97 = sld [smem:[#allocation2 + $0x3c]]
    %s98 = sld [smem:[#allocation2 + $0x3d]]
    %s99 = sld [smem:[#allocation2 + $0x3e]]
    %s100 = sld [smem:[#allocation2 + $0x3f]]
    %s101 = sld [smem:[#allocation2 + $0x40]]
    %v102 = vld [vmem:[#allocation6] sm:$0xff]
    %v103 = vld [vmem:[#allocation6 + $0x8] sm:$0xff]
    %v104 = vld [vmem:[#allocation6 + $0x10] sm:$0xff]
    %v105 = vld [vmem:[#allocation6 + $0x18] sm:$0xff]
    %v106 = vld [vmem:[#allocation6 + $0x20] sm:$0xff]
    %v107 = vld [vmem:[#allocation6 + $0x28] sm:$0xff]
    %v108 = vld [vmem:[#allocation6 + $0x30] sm:$0xff]
    %v109 = vld [vmem:[#allocation6 + $0x38] sm:$0xff]
    %v110 = vld [vmem:[#allocation6 + $0x40] sm:$0xff]
    %v111 = vld [vmem:[#allocation6 + $0x48] sm:$0xff]
    %v112 = vld [vmem:[#allocation6 + $0x50] sm:$0xff]
    %v113 = vld [vmem:[#allocation6 + $0x58] sm:$0xff]
    %v114 = vld [vmem:[#allocation6 + $0x60] sm:$0xff]
    %v115 = vld [vmem:[#allocation6 + $0x68] sm:$0xff]
    %v116 = vld [vmem:[#allocation6 + $0x70] sm:$0xff]
    %v117 = vld [vmem:[#allocation6 + $0x78] sm:$0xff]
    %v118 = vstv %s37
    %v119 = vmul.f32 %v102, %v118
    %v120 = vmul.f32 %v103, %v118
    %v121 = vmul.f32 %v104, %v118
    %v122 = vmul.f32 %v105, %v118
    %v123 = vmul.f32 %v106, %v118
    %v124 = vmul.f32 %v107, %v118
    %v125 = vmul.f32 %v108, %v118
    %v126 = vmul.f32 %v109, %v118
    %v127 = vstv %s53
    %v128 = vmul.f32 %v110, %v127
    %v129 = vmul.f32 %v111, %v127
    %v130 = vmul.f32 %v112, %v127
    %v131 = vmul.f32 %v113, %v127
    %v132 = vmul.f32 %v114, %v127
    %v133 = vmul.f32 %v115, %v127
    %v134 = vmul.f32 %v116, %v127
    %v135 = vmul.f32 %v117, %v127
    %v136 = vadd.f32 %v119, %v128
    %v137 = vadd.f32 %v120, %v129
    %v138 = vadd.f32 %v121, %v130
    %v139 = vadd.f32 %v122, %v131
    %v140 = vadd.f32 %v123, %v132
    %v141 = vadd.f32 %v124, %v133
    %v142 = vadd.f32 %v125, %v134
    %v143 = vadd.f32 %v126, %v135
    %v144 = vstv %s69
    %v145 = vadd.f32 %v136, %v144
    %v146 = vadd.f32 %v137, %v144
    %v147 = vadd.f32 %v138, %v144
    %v148 = vadd.f32 %v139, %v144
    %v149 = vadd.f32 %v140, %v144
    %v150 = vadd.f32 %v141, %v144
    %v151 = vadd.f32 %v142, %v144
    %v152 = vadd.f32 %v143, %v144
    %v153 = vmax.f32 %v145, 0.0
    %v154 = vmax.f32 %v146, 0.0
    %v155 = vmax.f32 %v147, 0.0
    %v156 = vmax.f32 %v148, 0.0
    %v157 = vmax.f32 %v149, 0.0
    %v158 = vmax.f32 %v150, 0.0
    %v159 = vmax.f32 %v151, 0.0
    %v160 = vmax.f32 %v152, 0.0
    %v161 = vstv %s85
    %v162 = vmul.f32 %v153, %v161
    %v163 = vmul.f32 %v154, %v161
    %v164 = vmul.f32 %v155, %v161
    %v165 = vmul.f32 %v156, %v161
    %v166 = vmul.f32 %v157, %v161
    %v167 = vmul.f32 %v158, %v161
    %v168 = vmul.f32 %v159, %v161
    %v169 = vmul.f32 %v160, %v161
    %v170 = vadd.f32 %v162, 0.0
    %v171 = vadd.f32 %v163, 0.0
    %v172 = vadd.f32 %v164, 0.0
    %v173 = vadd.f32 %v165, 0.0
    %v174 = vadd.f32 %v166, 0.0
    %v175 = vadd.f32 %v167, 0.0
    %v176 = vadd.f32 %v168, 0.0
    %v177 = vadd.f32 %v169, 0.0
    %v178 = vstv %s38
    %v179 = vmul.f32 %v102, %v178
    %v180 = vmul.f32 %v103, %v178
    %v181 = vmul.f32 %v104, %v178
    %v182 = vmul.f32 %v105, %v178
    %v183 = vmul.f32 %v106, %v178
    %v184 = vmul.f32 %v107, %v178
    %v185 = vmul.f32 %v108, %v178
    %v186 = vmul.f32 %v109, %v178
    %v187 = vstv %s54
    %v188 = vmul.f32 %v110, %v187
    %v189 = vmul.f32 %v111, %v187
    %v190 = vmul.f32 %v112, %v187
    %v191 = vmul.f32 %v113, %v187
    %v192 = vmul.f32 %v114, %v187
    %v193 = vmul.f32 %v115, %v187
    %v194 = vmul.f32 %v116, %v187
    %v195 = vmul.f32 %v117, %v187
    %v196 = vadd.f32 %v179, %v188
    %v197 = vadd.f32 %v180, %v189
    %v198 = vadd.f32 %v181, %v190
    %v199 = vadd.f32 %v182, %v191
    %v200 = vadd.f32 %v183, %v192
    %v201 = vadd.f32 %v184, %v193
    %v202 = vadd.f32 %v185, %v194
    %v203 = vadd.f32 %v186, %v195
    %v204 = vstv %s70
    %v205 = vadd.f32 %v196, %v204
    %v206 = vadd.f32 %v197, %v204
    %v207 = vadd.f32 %v198, %v204
    %v208 = vadd.f32 %v199, %v204
    %v209 = vadd.f32 %v200, %v204
    %v210 = vadd.f32 %v201, %v204
    %v211 = vadd.f32 %v202, %v204
    %v212 = vadd.f32 %v203, %v204
    %v213 = vmax.f32 %v205, 0.0
    %v214 = vmax.f32 %v206, 0.0
    %v215 = vmax.f32 %v207, 0.0
    %v216 = vmax.f32 %v208, 0.0
    %v217 = vmax.f32 %v209, 0.0
    %v218 = vmax.f32 %v210, 0.0
    %v219 = vmax.f32 %v211, 0.0
    %v220 = vmax.f32 %v212, 0.0
    %v221 = vstv %s86
    %v222 = vmul.f32 %v213, %v221
    %v223 = vmul.f32 %v214, %v221
    %v224 = vmul.f32 %v215, %v221
    %v225 = vmul.f32 %v216, %v221
    %v226 = vmul.f32 %v217, %v221
    %v227 = vmul.f32 %v218, %v221
    %v228 = vmul.f32 %v219, %v221
    %v229 = vmul.f32 %v220, %v221
    %v230 = vadd.f32 %v170, %v222
    %v231 = vadd.f32 %v171, %v223
    %v232 = vadd.f32 %v172, %v224
    %v233 = vadd.f32 %v173, %v225
    %v234 = vadd.f32 %v174, %v226
    %v235 = vadd.f32 %v175, %v227
    %v236 = vadd.f32 %v176, %v228
    %v237 = vadd.f32 %v177, %v229
    %v238 = vstv %s39
    %v239 = vmul.f32 %v102, %v238
    %v240 = vmul.f32 %v103, %v238
    %v241 = vmul.f32 %v104, %v238
    %v242 = vmul.f32 %v105, %v238
    %v243 = vmul.f32 %v106, %v238
    %v244 = vmul.f32 %v107, %v238
    %v245 = vmul.f32 %v108, %v238
    %v246 = vmul.f32 %v109, %v238
    %v247 = vstv %s55
    %v248 = vmul.f32 %v110, %v247
    %v249 = vmul.f32 %v111, %v247
    %v250 = vmul.f32 %v112, %v247
    %v251 = vmul.f32 %v113, %v247
    %v252 = vmul.f32 %v114, %v247
    %v253 = vmul.f32 %v115, %v247
    %v254 = vmul.f32 %v116, %v247
    %v255 = vmul.f32 %v117, %v247
    %v256 = vadd.f32 %v239, %v248
    %v257 = vadd.f32 %v240, %v249
    %v258 = vadd.f32 %v241, %v250
    %v259 = vadd.f32 %v242, %v251
    %v260 = vadd.f32 %v243, %v252
    %v261 = vadd.f32 %v244, %v253
    %v262 = vadd.f32 %v245, %v254
    %v263 = vadd.f32 %v246, %v255
    %v264 = vstv %s71
    %v265 = vadd.f32 %v256, %v264
    %v266 = vadd.f32 %v257, %v264
    %v267 = vadd.f32 %v258, %v264
    %v268 = vadd.f32 %v259, %v264
    %v269 = vadd.f32 %v260, %v264
    %v270 = vadd.f32 %v261, %v264
    %v271 = vadd.f32 %v262, %v264
    %v272 = vadd.f32 %v263, %v264
    %v273 = vmax.f32 %v265, 0.0
    %v274 = vmax.f32 %v266, 0.0
    %v275 = vmax.f32 %v267, 0.0
    %v276 = vmax.f32 %v268, 0.0
    %v277 = vmax.f32 %v269, 0.0
    %v278 = vmax.f32 %v270, 0.0
    %v279 = vmax.f32 %v271, 0.0
    %v280 = vmax.f32 %v272, 0.0
    %v281 = vstv %s87
    %v282 = vmul.f32 %v273, %v281
    %v283 = vmul.f32 %v274, %v281
    %v284 = vmul.f32 %v275, %v281
    %v285 = vmul.f32 %v276, %v281
    %v286 = vmul.f32 %v277, %v281
    %v287 = vmul.f32 %v278, %v281
    %v288 = vmul.f32 %v279, %v281
    %v289 = vmul.f32 %v280, %v281
    %v290 = vadd.f32 %v230, %v282
    %v291 = vadd.f32 %v231, %v283
    %v292 = vadd.f32 %v232, %v284
    %v293 = vadd.f32 %v233, %v285
    %v294 = vadd.f32 %v234, %v286
    %v295 = vadd.f32 %v235, %v287
    %v296 = vadd.f32 %v236, %v288
    %v297 = vadd.f32 %v237, %v289
    %v298 = vstv %s40
    %v299 = vmul.f32 %v102, %v298
    %v300 = vmul.f32 %v103, %v298
    %v301 = vmul.f32 %v104, %v298
    %v302 = vmul.f32 %v105, %v298
    %v303 = vmul.f32 %v106, %v298
    %v304 = vmul.f32 %v107, %v298
    %v305 = vmul.f32 %v108, %v298
    %v306 = vmul.f32 %v109, %v298
    %v307 = vstv %s56
    %v308 = vmul.f32 %v110, %v307
    %v309 = vmul.f32 %v111, %v307
    %v310 = vmul.f32 %v112, %v307
    %v311 = vmul.f32 %v113, %v307
    %v312 = vmul.f32 %v114, %v307
    %v313 = vmul.f32 %v115, %v307
    %v314 = vmul.f32 %v116, %v307
    %v315 = vmul.f32 %v117, %v307
    %v316 = vadd.f32 %v299, %v308
    %v317 = vadd.f32 %v300, %v309
    %v318 = vadd.f32 %v301, %v310
    %v319 = vadd.f32 %v302, %v311
    %v320 = vadd.f32 %v303, %v312
    %v321 = vadd.f32 %v304, %v313
    %v322 = vadd.f32 %v305, %v314
    %v323 = vadd.f32 %v306, %v315
    %v324 = vstv %s72
    %v325 = vadd.f32 %v316, %v324
    %v326 = vadd.f32 %v317, %v324
    %v327 = vadd.f32 %v318, %v324
    %v328 = vadd.f32 %v319, %v324
    %v329 = vadd.f32 %v320, %v324
    %v330 = vadd.f32 %v321, %v324
    %v331 = vadd.f32 %v322, %v324
    %v332 = vadd.f32 %v323, %v324
    %v333 = vmax.f32 %v325, 0.0
    %v334 = vmax.f32 %v326, 0.0
    %v335 = vmax.f32 %v327, 0.0
    %v336 = vmax.f32 %v328, 0.0
    %v337 = vmax.f32 %v329, 0.0
    %v338 = vmax.f32 %v330, 0.0
    %v339 = vmax.f32 %v331, 0.0
    %v340 = vmax.f32 %v332, 0.0
    %v341 = vstv %s88
    %v342 = vmul.f32 %v333, %v341
    %v343 = vmul.f32 %v334, %v341
    %v344 = vmul.f32 %v335, %v341
    %v345 = vmul.f32 %v336, %v341
    %v346 = vmul.f32 %v337, %v341
    %v347 = vmul.f32 %v338, %v341
    %v348 = vmul.f32 %v339, %v341
    %v349 = vmul.f32 %v340, %v341
    %v350 = vadd.f32 %v290, %v342
    %v351 = vadd.f32 %v291, %v343
    %v352 = vadd.f32 %v292, %v344
    %v353 = vadd.f32 %v293, %v345
    %v354 = vadd.f32 %v294, %v346
    %v355 = vadd.f32 %v295, %v347
    %v356 = vadd.f32 %v296, %v348
    %v357 = vadd.f32 %v297, %v349
    %v358 = vstv %s41
    %v359 = vmul.f32 %v102, %v358
    %v360 = vmul.f32 %v103, %v358
    %v361 = vmul.f32 %v104, %v358
    %v362 = vmul.f32 %v105, %v358
    %v363 = vmul.f32 %v106, %v358
    %v364 = vmul.f32 %v107, %v358
    %v365 = vmul.f32 %v108, %v358
    %v366 = vmul.f32 %v109, %v358
    %v367 = vstv %s57
    %v368 = vmul.f32 %v110, %v367
    %v369 = vmul.f32 %v111, %v367
    %v370 = vmul.f32 %v112, %v367
    %v371 = vmul.f32 %v113, %v367
    %v372 = vmul.f32 %v114, %v367
    %v373 = vmul.f32 %v115, %v367
    %v374 = vmul.f32 %v116, %v367
    %v375 = vmul.f32 %v117, %v367
    %v376 = vadd.f32 %v359, %v368
    %v377 = vadd.f32 %v360, %v369
    %v378 = vadd.f32 %v361, %v370
    %v379 = vadd.f32 %v362, %v371
    %v380 = vadd.f32 %v363, %v372
    %v381 = vadd.f32 %v364, %v373
    %v382 = vadd.f32 %v365, %v374
    %v383 = vadd.f32 %v366, %v375
    %v384 = vstv %s73
    %v385 = vadd.f32 %v376, %v384
    %v386 = vadd.f32 %v377, %v384
    %v387 = vadd.f32 %v378, %v384
    %v388 = vadd.f32 %v379, %v384
    %v389 = vadd.f32 %v380, %v384
    %v390 = vadd.f32 %v381, %v384
    %v391 = vadd.f32 %v382, %v384
    %v392 = vadd.f32 %v383, %v384
    %v393 = vmax.f32 %v385, 0.0
    %v394 = vmax.f32 %v386, 0.0
    %v395 = vmax.f32 %v387, 0.0
    %v396 = vmax.f32 %v388, 0.0
    %v397 = vmax.f32 %v389, 0.0
    %v398 = vmax.f32 %v390, 0.0
    %v399 = vmax.f32 %v391, 0.0
    %v400 = vmax.f32 %v392, 0.0
    %v401 = vstv %s89
    %v402 = vmul.f32 %v393, %v401
    %v403 = vmul.f32 %v394, %v401
    %v404 = vmul.f32 %v395, %v401
    %v405 = vmul.f32 %v396, %v401
    %v406 = vmul.f32 %v397, %v401
    %v407 = vmul.f32 %v398, %v401
    %v408 = vmul.f32 %v399, %v401
    %v409 = vmul.f32 %v400, %v401
    %v410 = vadd.f32 %v350, %v402
    %v411 = vadd.f32 %v351, %v403
    %v412 = vadd.f32 %v352, %v404
    %v413 = vadd.f32 %v353, %v405
    %v414 = vadd.f32 %v354, %v406
    %v415 = vadd.f32 %v355, %v407
    %v416 = vadd.f32 %v356, %v408
    %v417 = vadd.f32 %v357, %v409
    %v418 = vstv %s42
    %v419 = vmul.f32 %v102, %v418
    %v420 = vmul.f32 %v103, %v418
    %v421 = vmul.f32 %v104, %v418
    %v422 = vmul.f32 %v105, %v418
    %v423 = vmul.f32 %v106, %v418
    %v424 = vmul.f32 %v107, %v418
    %v425 = vmul.f32 %v108, %v418
    %v426 = vmul.f32 %v109, %v418
    %v427 = vstv %s58
    %v428 = vmul.f32 %v110, %v427
    %v429 = vmul.f32 %v111, %v427
    %v430 = vmul.f32 %v112, %v427
    %v431 = vmul.f32 %v113, %v427
    %v432 = vmul.f32 %v114, %v427
    %v433 = vmul.f32 %v115, %v427
    %v434 = vmul.f32 %v116, %v427
    %v435 = vmul.f32 %v117, %v427
    %v436 = vadd.f32 %v419, %v428
    %v437 = vadd.f32 %v420, %v429
    %v438 = vadd.f32 %v421, %v430
    %v439 = vadd.f32 %v422, %v431
    %v440 = vadd.f32 %v423, %v432
    %v441 = vadd.f32 %v424, %v433
    %v442 = vadd.f32 %v425, %v434
    %v443 = vadd.f32 %v426, %v435
    %v444 = vstv %s74
    %v445 = vadd.f32 %v436, %v444
    %v446 = vadd.f32 %v437, %v444
    %v447 = vadd.f32 %v438, %v444
    %v448 = vadd.f32 %v439, %v444
    %v449 = vadd.f32 %v440, %v444
    %v450 = vadd.f32 %v441, %v444
    %v451 = vadd.f32 %v442, %v444
    %v452 = vadd.f32 %v443, %v444
    %v453 = vmax.f32 %v445, 0.0
    %v454 = vmax.f32 %v446, 0.0
    %v455 = vmax.f32 %v447, 0.0
    %v456 = vmax.f32 %v448, 0.0
    %v457 = vmax.f32 %v449, 0.0
    %v458 = vmax.f32 %v450, 0.0
    %v459 = vmax.f32 %v451, 0.0
    %v460 = vmax.f32 %v452, 0.0
    %v461 = vstv %s90
    %v462 = vmul.f32 %v453, %v461
    %v463 = vmul.f32 %v454, %v461
    %v464 = vmul.f32 %v455, %v461
    %v465 = vmul.f32 %v456, %v461
    %v466 = vmul.f32 %v457, %v461
    %v467 = vmul.f32 %v458, %v461
    %v468 = vmul.f32 %v459, %v461
    %v469 = vmul.f32 %v460, %v461
    %v470 = vadd.f32 %v410, %v462
    %v471 = vadd.f32 %v411, %v463
    %v472 = vadd.f32 %v412, %v464
    %v473 = vadd.f32 %v413, %v465
    %v474 = vadd.f32 %v414, %v466
    %v475 = vadd.f32 %v415, %v467
    %v476 = vadd.f32 %v416, %v468
    %v477 = vadd.f32 %v417, %v469
    %v478 = vstv %s43
    %v479 = vmul.f32 %v102, %v478
    %v480 = vmul.f32 %v103, %v478
    %v481 = vmul.f32 %v104, %v478
    %v482 = vmul.f32 %v105, %v478
    %v483 = vmul.f32 %v106, %v478
    %v484 = vmul.f32 %v107, %v478
    %v485 = vmul.f32 %v108, %v478
    %v486 = vmul.f32 %v109, %v478
    %v487 = vstv %s59
    %v488 = vmul.f32 %v110, %v487
    %v489 = vmul.f32 %v111, %v487
    %v490 = vmul.f32 %v112, %v487
    %v491 = vmul.f32 %v113, %v487
    %v492 = vmul.f32 %v114, %v487
    %v493 = vmul.f32 %v115, %v487
    %v494 = vmul.f32 %v116, %v487
    %v495 = vmul.f32 %v117, %v487
    %v496 = vadd.f32 %v479, %v488
    %v497 = vadd.f32 %v480, %v489
    %v498 = vadd.f32 %v481, %v490
    %v499 = vadd.f32 %v482, %v491
    %v500 = vadd.f32 %v483, %v492
    %v501 = vadd.f32 %v484, %v493
    %v502 = vadd.f32 %v485, %v494
    %v503 = vadd.f32 %v486, %v495
    %v504 = vstv %s75
    %v505 = vadd.f32 %v496, %v504
    %v506 = vadd.f32 %v497, %v504
    %v507 = vadd.f32 %v498, %v504
    %v508 = vadd.f32 %v499, %v504
    %v509 = vadd.f32 %v500, %v504
    %v510 = vadd.f32 %v501, %v504
    %v511 = vadd.f32 %v502, %v504
    %v512 = vadd.f32 %v503, %v504
    %v513 = vmax.f32 %v505, 0.0
    %v514 = vmax.f32 %v506, 0.0
    %v515 = vmax.f32 %v507, 0.0
    %v516 = vmax.f32 %v508, 0.0
    %v517 = vmax.f32 %v509, 0.0
    %v518 = vmax.f32 %v510, 0.0
    %v519 = vmax.f32 %v511, 0.0
    %v520 = vmax.f32 %v512, 0.0
    %v521 = vstv %s91
    %v522 = vmul.f32 %v513, %v521
    %v523 = vmul.f32 %v514, %v521
    %v524 = vmul.f32 %v515, %v521
    %v525 = vmul.f32 %v516, %v521
    %v526 = vmul.f32 %v517, %v521
    %v527 = vmul.f32 %v518, %v521
    %v528 = vmul.f32 %v519, %v521
    %v529 = vmul.f32 %v520, %v521
    %v530 = vadd.f32 %v470, %v522
    %v531 = vadd.f32 %v471, %v523
    %v532 = vadd.f32 %v472, %v524
    %v533 = vadd.f32 %v473, %v525
    %v534 = vadd.f32 %v474, %v526
    %v535 = vadd.f32 %v475, %v527
    %v536 = vadd.f32 %v476, %v528
    %v537 = vadd.f32 %v477, %v529
    %v538 = vstv %s44
    %v539 = vmul.f32 %v102, %v538
    %v540 = vmul.f32 %v103, %v538
    %v541 = vmul.f32 %v104, %v538
    %v542 = vmul.f32 %v105, %v538
    %v543 = vmul.f32 %v106, %v538
    %v544 = vmul.f32 %v107, %v538
    %v545 = vmul.f32 %v108, %v538
    %v546 = vmul.f32 %v109, %v538
    %v547 = vstv %s60
    %v548 = vmul.f32 %v110, %v547
    %v549 = vmul.f32 %v111, %v547
    %v550 = vmul.f32 %v112, %v547
    %v551 = vmul.f32 %v113, %v547
    %v552 = vmul.f32 %v114, %v547
    %v553 = vmul.f32 %v115, %v547
    %v554 = vmul.f32 %v116, %v547
    %v555 = vmul.f32 %v117, %v547
    %v556 = vadd.f32 %v539, %v548
    %v557 = vadd.f32 %v540, %v549
    %v558 = vadd.f32 %v541, %v550
    %v559 = vadd.f32 %v542, %v551
    %v560 = vadd.f32 %v543, %v552
    %v561 = vadd.f32 %v544, %v553
    %v562 = vadd.f32 %v545, %v554
    %v563 = vadd.f32 %v546, %v555
    %v564 = vstv %s76
    %v565 = vadd.f32 %v556, %v564
    %v566 = vadd.f32 %v557, %v564
    %v567 = vadd.f32 %v558, %v564
    %v568 = vadd.f32 %v559, %v564
    %v569 = vadd.f32 %v560, %v564
    %v570 = vadd.f32 %v561, %v564
    %v571 = vadd.f32 %v562, %v564
    %v572 = vadd.f32 %v563, %v564
    %v573 = vmax.f32 %v565, 0.0
    %v574 = vmax.f32 %v566, 0.0
    %v575 = vmax.f32 %v567, 0.0
    %v576 = vmax.f32 %v568, 0.0
    %v577 = vmax.f32 %v569, 0.0
    %v578 = vmax.f32 %v570, 0.0
    %v579 = vmax.f32 %v571, 0.0
    %v580 = vmax.f32 %v572, 0.0
    %v581 = vstv %s92
    %v582 = vmul.f32 %v573, %v581
    %v583 = vmul.f32 %v574, %v581
    %v584 = vmul.f32 %v575, %v581
    %v585 = vmul.f32 %v576, %v581
    %v586 = vmul.f32 %v577, %v581
    %v587 = vmul.f32 %v578, %v581
    %v588 = vmul.f32 %v579, %v581
    %v589 = vmul.f32 %v580, %v581
    %v590 = vadd.f32 %v530, %v582
    %v591 = vadd.f32 %v531, %v583
    %v592 = vadd.f32 %v532, %v584
    %v593 = vadd.f32 %v533, %v585
    %v594 = vadd.f32 %v534, %v586
    %v595 = vadd.f32 %v535, %v587
    %v596 = vadd.f32 %v536, %v588
    %v597 = vadd.f32 %v537, %v589
    %v598 = vstv %s45
    %v599 = vmul.f32 %v102, %v598
    %v600 = vmul.f32 %v103, %v598
    %v601 = vmul.f32 %v104, %v598
    %v602 = vmul.f32 %v105, %v598
    %v603 = vmul.f32 %v106, %v598
    %v604 = vmul.f32 %v107, %v598
    %v605 = vmul.f32 %v108, %v598
    %v606 = vmul.f32 %v109, %v598
    %v607 = vstv %s61
    %v608 = vmul.f32 %v110, %v607
    %v609 = vmul.f32 %v111, %v607
    %v610 = vmul.f32 %v112, %v607
    %v611 = vmul.f32 %v113, %v607
    %v612 = vmul.f32 %v114, %v607
    %v613 = vmul.f32 %v115, %v607
    %v614 = vmul.f32 %v116, %v607
    %v615 = vmul.f32 %v117, %v607
    %v616 = vadd.f32 %v599, %v608
    %v617 = vadd.f32 %v600, %v609
    %v618 = vadd.f32 %v601, %v610
    %v619 = vadd.f32 %v602, %v611
    %v620 = vadd.f32 %v603, %v612
    %v621 = vadd.f32 %v604, %v613
    %v622 = vadd.f32 %v605, %v614
    %v623 = vadd.f32 %v606, %v615
    %v624 = vstv %s77
    %v625 = vadd.f32 %v616, %v624
    %v626 = vadd.f32 %v617, %v624
    %v627 = vadd.f32 %v618, %v624
    %v628 = vadd.f32 %v619, %v624
    %v629 = vadd.f32 %v620, %v624
    %v630 = vadd.f32 %v621, %v624
    %v631 = vadd.f32 %v622, %v624
    %v632 = vadd.f32 %v623, %v624
    %v633 = vmax.f32 %v625, 0.0
    %v634 = vmax.f32 %v626, 0.0
    %v635 = vmax.f32 %v627, 0.0
    %v636 = vmax.f32 %v628, 0.0
    %v637 = vmax.f32 %v629, 0.0
    %v638 = vmax.f32 %v630, 0.0
    %v639 = vmax.f32 %v631, 0.0
    %v640 = vmax.f32 %v632, 0.0
    %v641 = vstv %s93
    %v642 = vmul.f32 %v633, %v641
    %v643 = vmul.f32 %v634, %v641
    %v644 = vmul.f32 %v635, %v641
    %v645 = vmul.f32 %v636, %v641
    %v646 = vmul.f32 %v637, %v641
    %v647 = vmul.f32 %v638, %v641
    %v648 = vmul.f32 %v639, %v641
    %v649 = vmul.f32 %v640, %v641
    %v650 = vadd.f32 %v590, %v642
    %v651 = vadd.f32 %v591, %v643
    %v652 = vadd.f32 %v592, %v644
    %v653 = vadd.f32 %v593, %v645
    %v654 = vadd.f32 %v594, %v646
    %v655 = vadd.f32 %v595, %v647
    %v656 = vadd.f32 %v596, %v648
    %v657 = vadd.f32 %v597, %v649
    %v658 = vstv %s46
    %v659 = vmul.f32 %v102, %v658
    %v660 = vmul.f32 %v103, %v658
    %v661 = vmul.f32 %v104, %v658
    %v662 = vmul.f32 %v105, %v658
    %v663 = vmul.f32 %v106, %v658
    %v664 = vmul.f32 %v107, %v658
    %v665 = vmul.f32 %v108, %v658
    %v666 = vmul.f32 %v109, %v658
    %v667 = vstv %s62
    %v668 = vmul.f32 %v110, %v667
    %v669 = vmul.f32 %v111, %v667
    %v670 = vmul.f32 %v112, %v667
    %v671 = vmul.f32 %v113, %v667
    %v672 = vmul.f32 %v114, %v667
    %v673 = vmul.f32 %v115, %v667
    %v674 = vmul.f32 %v116, %v667
    %v675 = vmul.f32 %v117, %v667
    %v676 = vadd.f32 %v659, %v668
    %v677 = vadd.f32 %v660, %v669
    %v678 = vadd.f32 %v661, %v670
    %v679 = vadd.f32 %v662, %v671
    %v680 = vadd.f32 %v663, %v672
    %v681 = vadd.f32 %v664, %v673
    %v682 = vadd.f32 %v665, %v674
    %v683 = vadd.f32 %v666, %v675
    %v684 = vstv %s78
    %v685 = vadd.f32 %v676, %v684
    %v686 = vadd.f32 %v677, %v684
    %v687 = vadd.f32 %v678, %v684
    %v688 = vadd.f32 %v679, %v684
    %v689 = vadd.f32 %v680, %v684
    %v690 = vadd.f32 %v681, %v684
    %v691 = vadd.f32 %v682, %v684
    %v692 = vadd.f32 %v683, %v684
    %v693 = vmax.f32 %v685, 0.0
    %v694 = vmax.f32 %v686, 0.0
    %v695 = vmax.f32 %v687, 0.0
    %v696 = vmax.f32 %v688, 0.0
    %v697 = vmax.f32 %v689, 0.0
    %v698 = vmax.f32 %v690, 0.0
    %v699 = vmax.f32 %v691, 0.0
    %v700 = vmax.f32 %v692, 0.0
    %v701 = vstv %s94
    %v702 = vmul.f32 %v693, %v701
    %v703 = vmul.f32 %v694, %v701
    %v704 = vmul.f32 %v695, %v701
    %v705 = vmul.f32 %v696, %v701
    %v706 = vmul.f32 %v697, %v701
    %v707 = vmul.f32 %v698, %v701
    %v708 = vmul.f32 %v699, %v701
    %v709 = vmul.f32 %v700, %v701
    %v710 = vadd.f32 %v650, %v702
    %v711 = vadd.f32 %v651, %v703
    %v712 = vadd.f32 %v652, %v704
    %v713 = vadd.f32 %v653, %v705
    %v714 = vadd.f32 %v654, %v706
    %v715 = vadd.f32 %v655, %v707
    %v716 = vadd.f32 %v656, %v708
    %v717 = vadd.f32 %v657, %v709
    %v718 = vstv %s47
    %v719 = vmul.f32 %v102, %v718
    %v720 = vmul.f32 %v103, %v718
    %v721 = vmul.f32 %v104, %v718
    %v722 = vmul.f32 %v105, %v718
    %v723 = vmul.f32 %v106, %v718
    %v724 = vmul.f32 %v107, %v718
    %v725 = vmul.f32 %v108, %v718
    %v726 = vmul.f32 %v109, %v718
    %v727 = vstv %s63
    %v728 = vmul.f32 %v110, %v727
    %v729 = vmul.f32 %v111, %v727
    %v730 = vmul.f32 %v112, %v727
    %v731 = vmul.f32 %v113, %v727
    %v732 = vmul.f32 %v114, %v727
    %v733 = vmul.f32 %v115, %v727
    %v734 = vmul.f32 %v116, %v727
    %v735 = vmul.f32 %v117, %v727
    %v736 = vadd.f32 %v719, %v728
    %v737 = vadd.f32 %v720, %v729
    %v738 = vadd.f32 %v721, %v730
    %v739 = vadd.f32 %v722, %v731
    %v740 = vadd.f32 %v723, %v732
    %v741 = vadd.f32 %v724, %v733
    %v742 = vadd.f32 %v725, %v734
    %v743 = vadd.f32 %v726, %v735
    %v744 = vstv %s79
    %v745 = vadd.f32 %v736, %v744
    %v746 = vadd.f32 %v737, %v744
    %v747 = vadd.f32 %v738, %v744
    %v748 = vadd.f32 %v739, %v744
    %v749 = vadd.f32 %v740, %v744
    %v750 = vadd.f32 %v741, %v744
    %v751 = vadd.f32 %v742, %v744
    %v752 = vadd.f32 %v743, %v744
    %v753 = vmax.f32 %v745, 0.0
    %v754 = vmax.f32 %v746, 0.0
    %v755 = vmax.f32 %v747, 0.0
    %v756 = vmax.f32 %v748, 0.0
    %v757 = vmax.f32 %v749, 0.0
    %v758 = vmax.f32 %v750, 0.0
    %v759 = vmax.f32 %v751, 0.0
    %v760 = vmax.f32 %v752, 0.0
    %v761 = vstv %s95
    %v762 = vmul.f32 %v753, %v761
    %v763 = vmul.f32 %v754, %v761
    %v764 = vmul.f32 %v755, %v761
    %v765 = vmul.f32 %v756, %v761
    %v766 = vmul.f32 %v757, %v761
    %v767 = vmul.f32 %v758, %v761
    %v768 = vmul.f32 %v759, %v761
    %v769 = vmul.f32 %v760, %v761
    %v770 = vadd.f32 %v710, %v762
    %v771 = vadd.f32 %v711, %v763
    %v772 = vadd.f32 %v712, %v764
    %v773 = vadd.f32 %v713, %v765
    %v774 = vadd.f32 %v714, %v766
    %v775 = vadd.f32 %v715, %v767
    %v776 = vadd.f32 %v716, %v768
    %v777 = vadd.f32 %v717, %v769
    %v778 = vstv %s48
    %v779 = vmul.f32 %v102, %v778
    %v780 = vmul.f32 %v103, %v778
    %v781 = vmul.f32 %v104, %v778
    %v782 = vmul.f32 %v105, %v778
    %v783 = vmul.f32 %v106, %v778
    %v784 = vmul.f32 %v107, %v778
    %v785 = vmul.f32 %v108, %v778
    %v786 = vmul.f32 %v109, %v778
    %v787 = vstv %s64
    %v788 = vmul.f32 %v110, %v787
    %v789 = vmul.f32 %v111, %v787
    %v790 = vmul.f32 %v112, %v787
    %v791 = vmul.f32 %v113, %v787
    %v792 = vmul.f32 %v114, %v787
    %v793 = vmul.f32 %v115, %v787
    %v794 = vmul.f32 %v116, %v787
    %v795 = vmul.f32 %v117, %v787
    %v796 = vadd.f32 %v779, %v788
    %v797 = vadd.f32 %v780, %v789
    %v798 = vadd.f32 %v781, %v790
    %v799 = vadd.f32 %v782, %v791
    %v800 = vadd.f32 %v783, %v792
    %v801 = vadd.f32 %v784, %v793
    %v802 = vadd.f32 %v785, %v794
    %v803 = vadd.f32 %v786, %v795
    %v804 = vstv %s80
    %v805 = vadd.f32 %v796, %v804
    %v806 = vadd.f32 %v797, %v804
    %v807 = vadd.f32 %v798, %v804
    %v808 = vadd.f32 %v799, %v804
    %v809 = vadd.f32 %v800, %v804
    %v810 = vadd.f32 %v801, %v804
    %v811 = vadd.f32 %v802, %v804
    %v812 = vadd.f32 %v803, %v804
    %v813 = vmax.f32 %v805, 0.0
    %v814 = vmax.f32 %v806, 0.0
    %v815 = vmax.f32 %v807, 0.0
    %v816 = vmax.f32 %v808, 0.0
    %v817 = vmax.f32 %v809, 0.0
    %v818 = vmax.f32 %v810, 0.0
    %v819 = vmax.f32 %v811, 0.0
    %v820 = vmax.f32 %v812, 0.0
    %v821 = vstv %s96
    %v822 = vmul.f32 %v813, %v821
    %v823 = vmul.f32 %v814, %v821
    %v824 = vmul.f32 %v815, %v821
    %v825 = vmul.f32 %v816, %v821
    %v826 = vmul.f32 %v817, %v821
    %v827 = vmul.f32 %v818, %v821
    %v828 = vmul.f32 %v819, %v821
    %v829 = vmul.f32 %v820, %v821
    %v830 = vadd.f32 %v770, %v822
    %v831 = vadd.f32 %v771, %v823
    %v832 = vadd.f32 %v772, %v824
    %v833 = vadd.f32 %v773, %v825
    %v834 = vadd.f32 %v774, %v826
    %v835 = vadd.f32 %v775, %v827
    %v836 = vadd.f32 %v776, %v828
    %v837 = vadd.f32 %v777, %v829
    %v838 = vstv %s49
    %v839 = vmul.f32 %v102, %v838
    %v840 = vmul.f32 %v103, %v838
    %v841 = vmul.f32 %v104, %v838
    %v842 = vmul.f32 %v105, %v838
    %v843 = vmul.f32 %v106, %v838
    %v844 = vmul.f32 %v107, %v838
    %v845 = vmul.f32 %v108, %v838
    %v846 = vmul.f32 %v109, %v838
    %v847 = vstv %s65
    %v848 = vmul.f32 %v110, %v847
    %v849 = vmul.f32 %v111, %v847
    %v850 = vmul.f32 %v112, %v847
    %v851 = vmul.f32 %v113, %v847
    %v852 = vmul.f32 %v114, %v847
    %v853 = vmul.f32 %v115, %v847
    %v854 = vmul.f32 %v116, %v847
    %v855 = vmul.f32 %v117, %v847
    %v856 = vadd.f32 %v839, %v848
    %v857 = vadd.f32 %v840, %v849
    %v858 = vadd.f32 %v841, %v850
    %v859 = vadd.f32 %v842, %v851
    %v860 = vadd.f32 %v843, %v852
    %v861 = vadd.f32 %v844, %v853
    %v862 = vadd.f32 %v845, %v854
    %v863 = vadd.f32 %v846, %v855
    %v864 = vstv %s81
    %v865 = vadd.f32 %v856, %v864
    %v866 = vadd.f32 %v857, %v864
    %v867 = vadd.f32 %v858, %v864
    %v868 = vadd.f32 %v859, %v864
    %v869 = vadd.f32 %v860, %v864
    %v870 = vadd.f32 %v861, %v864
    %v871 = vadd.f32 %v862, %v864
    %v872 = vadd.f32 %v863, %v864
    %v873 = vmax.f32 %v865, 0.0
    %v874 = vmax.f32 %v866, 0.0
    %v875 = vmax.f32 %v867, 0.0
    %v876 = vmax.f32 %v868, 0.0
    %v877 = vmax.f32 %v869, 0.0
    %v878 = vmax.f32 %v870, 0.0
    %v879 = vmax.f32 %v871, 0.0
    %v880 = vmax.f32 %v872, 0.0
    %v881 = vstv %s97
    %v882 = vmul.f32 %v873, %v881
    %v883 = vmul.f32 %v874, %v881
    %v884 = vmul.f32 %v875, %v881
    %v885 = vmul.f32 %v876, %v881
    %v886 = vmul.f32 %v877, %v881
    %v887 = vmul.f32 %v878, %v881
    %v888 = vmul.f32 %v879, %v881
    %v889 = vmul.f32 %v880, %v881
    %v890 = vadd.f32 %v830, %v882
    %v891 = vadd.f32 %v831, %v883
    %v892 = vadd.f32 %v832, %v884
    %v893 = vadd.f32 %v833, %v885
    %v894 = vadd.f32 %v834, %v886
    %v895 = vadd.f32 %v835, %v887
    %v896 = vadd.f32 %v836, %v888
    %v897 = vadd.f32 %v837, %v889
    %v898 = vstv %s50
    %v899 = vmul.f32 %v102, %v898
    %v900 = vmul.f32 %v103, %v898
    %v901 = vmul.f32 %v104, %v898
    %v902 = vmul.f32 %v105, %v898
    %v903 = vmul.f32 %v106, %v898
    %v904 = vmul.f32 %v107, %v898
    %v905 = vmul.f32 %v108, %v898
    %v906 = vmul.f32 %v109, %v898
    %v907 = vstv %s66
    %v908 = vmul.f32 %v110, %v907
    %v909 = vmul.f32 %v111, %v907
    %v910 = vmul.f32 %v112, %v907
    %v911 = vmul.f32 %v113, %v907
    %v912 = vmul.f32 %v114, %v907
    %v913 = vmul.f32 %v115, %v907
    %v914 = vmul.f32 %v116, %v907
    %v915 = vmul.f32 %v117, %v907
    %v916 = vadd.f32 %v899, %v908
    %v917 = vadd.f32 %v900, %v909
    %v918 = vadd.f32 %v901, %v910
    %v919 = vadd.f32 %v902, %v911
    %v920 = vadd.f32 %v903, %v912
    %v921 = vadd.f32 %v904, %v913
    %v922 = vadd.f32 %v905, %v914
    %v923 = vadd.f32 %v906, %v915
    %v924 = vstv %s82
    %v925 = vadd.f32 %v916, %v924
    %v926 = vadd.f32 %v917, %v924
    %v927 = vadd.f32 %v918, %v924
    %v928 = vadd.f32 %v919, %v924
    %v929 = vadd.f32 %v920, %v924
    %v930 = vadd.f32 %v921, %v924
    %v931 = vadd.f32 %v922, %v924
    %v932 = vadd.f32 %v923, %v924
    %v933 = vmax.f32 %v925, 0.0
    %v934 = vmax.f32 %v926, 0.0
    %v935 = vmax.f32 %v927, 0.0
    %v936 = vmax.f32 %v928, 0.0
    %v937 = vmax.f32 %v929, 0.0
    %v938 = vmax.f32 %v930, 0.0
    %v939 = vmax.f32 %v931, 0.0
    %v940 = vmax.f32 %v932, 0.0
    %v941 = vstv %s98
    %v942 = vmul.f32 %v933, %v941
    %v943 = vmul.f32 %v934, %v941
    %v944 = vmul.f32 %v935, %v941
    %v945 = vmul.f32 %v936, %v941
    %v946 = vmul.f32 %v937, %v941
    %v947 = vmul.f32 %v938, %v941
    %v948 = vmul.f32 %v939, %v941
    %v949 = vmul.f32 %v940, %v941
    %v950 = vadd.f32 %v890, %v942
    %v951 = vadd.f32 %v891, %v943
    %v952 = vadd.f32 %v892, %v944
    %v953 = vadd.f32 %v893, %v945
    %v954 = vadd.f32 %v894, %v946
    %v955 = vadd.f32 %v895, %v947
    %v956 = vadd.f32 %v896, %v948
    %v957 = vadd.f32 %v897, %v949
    %v958 = vstv %s51
    %v959 = vmul.f32 %v102, %v958
    %v960 = vmul.f32 %v103, %v958
    %v961 = vmul.f32 %v104, %v958
    %v962 = vmul.f32 %v105, %v958
    %v963 = vmul.f32 %v106, %v958
    %v964 = vmul.f32 %v107, %v958
    %v965 = vmul.f32 %v108, %v958
    %v966 = vmul.f32 %v109, %v958
    %v967 = vstv %s67
    %v968 = vmul.f32 %v110, %v967
    %v969 = vmul.f32 %v111, %v967
    %v970 = vmul.f32 %v112, %v967
    %v971 = vmul.f32 %v113, %v967
    %v972 = vmul.f32 %v114, %v967
    %v973 = vmul.f32 %v115, %v967
    %v974 = vmul.f32 %v116, %v967
    %v975 = vmul.f32 %v117, %v967
    %v976 = vadd.f32 %v959, %v968
    %v977 = vadd.f32 %v960, %v969
    %v978 = vadd.f32 %v961, %v970
    %v979 = vadd.f32 %v962, %v971
    %v980 = vadd.f32 %v963, %v972
    %v981 = vadd.f32 %v964, %v973
    %v982 = vadd.f32 %v965, %v974
    %v983 = vadd.f32 %v966, %v975
    %v984 = vstv %s83
    %v985 = vadd.f32 %v976, %v984
    %v986 = vadd.f32 %v977, %v984
    %v987 = vadd.f32 %v978, %v984
    %v988 = vadd.f32 %v979, %v984
    %v989 = vadd.f32 %v980, %v984
    %v990 = vadd.f32 %v981, %v984
    %v991 = vadd.f32 %v982, %v984
    %v992 = vadd.f32 %v983, %v984
    %v993 = vmax.f32 %v985, 0.0
    %v994 = vmax.f32 %v986, 0.0
    %v995 = vmax.f32 %v987, 0.0
    %v996 = vmax.f32 %v988, 0.0
    %v997 = vmax.f32 %v989, 0.0
    %v998 = vmax.f32 %v990, 0.0
    %v999 = vmax.f32 %v991, 0.0
    %v1000 = vmax.f32 %v992, 0.0
    %v1001 = vstv %s99
    %v1002 = vmul.f32 %v993, %v1001
    %v1003 = vmul.f32 %v994, %v1001
    %v1004 = vmul.f32 %v995, %v1001
    %v1005 = vmul.f32 %v996, %v1001
    %v1006 = vmul.f32 %v997, %v1001
    %v1007 = vmul.f32 %v998, %v1001
    %v1008 = vmul.f32 %v999, %v1001
    %v1009 = vmul.f32 %v1000, %v1001
    %v1010 = vadd.f32 %v950, %v1002
    %v1011 = vadd.f32 %v951, %v1003
    %v1012 = vadd.f32 %v952, %v1004
    %v1013 = vadd.f32 %v953, %v1005
    %v1014 = vadd.f32 %v954, %v1006
    %v1015 = vadd.f32 %v955, %v1007
    %v1016 = vadd.f32 %v956, %v1008
    %v1017 = vadd.f32 %v957, %v1009
    %v1018 = vstv %s52
    %v1019 = vmul.f32 %v102, %v1018
    %v1020 = vmul.f32 %v103, %v1018
    %v1021 = vmul.f32 %v104, %v1018
    %v1022 = vmul.f32 %v105, %v1018
    %v1023 = vmul.f32 %v106, %v1018
    %v1024 = vmul.f32 %v107, %v1018
    %v1025 = vmul.f32 %v108, %v1018
    %v1026 = vmul.f32 %v109, %v1018
    %v1027 = vstv %s68
    %v1028 = vmul.f32 %v110, %v1027
    %v1029 = vmul.f32 %v111, %v1027
    %v1030 = vmul.f32 %v112, %v1027
    %v1031 = vmul.f32 %v113, %v1027
    %v1032 = vmul.f32 %v114, %v1027
    %v1033 = vmul.f32 %v115, %v1027
    %v1034 = vmul.f32 %v116, %v1027
    %v1035 = vmul.f32 %v117, %v1027
    %v1036 = vadd.f32 %v1019, %v1028
    %v1037 = vadd.f32 %v1020, %v1029
    %v1038 = vadd.f32 %v1021, %v1030
    %v1039 = vadd.f32 %v1022, %v1031
    %v1040 = vadd.f32 %v1023, %v1032
    %v1041 = vadd.f32 %v1024, %v1033
    %v1042 = vadd.f32 %v1025, %v1034
    %v1043 = vadd.f32 %v1026, %v1035
    %v1044 = vstv %s84
    %v1045 = vadd.f32 %v1036, %v1044
    %v1046 = vadd.f32 %v1037, %v1044
    %v1047 = vadd.f32 %v1038, %v1044
    %v1048 = vadd.f32 %v1039, %v1044
    %v1049 = vadd.f32 %v1040, %v1044
    %v1050 = vadd.f32 %v1041, %v1044
    %v1051 = vadd.f32 %v1042, %v1044
    %v1052 = vadd.f32 %v1043, %v1044
    %v1053 = vmax.f32 %v1045, 0.0
    %v1054 = vmax.f32 %v1046, 0.0
    %v1055 = vmax.f32 %v1047, 0.0
    %v1056 = vmax.f32 %v1048, 0.0
    %v1057 = vmax.f32 %v1049, 0.0
    %v1058 = vmax.f32 %v1050, 0.0
    %v1059 = vmax.f32 %v1051, 0.0
    %v1060 = vmax.f32 %v1052, 0.0
    %v1061 = vstv %s100
    %v1062 = vmul.f32 %v1053, %v1061
    %v1063 = vmul.f32 %v1054, %v1061
    %v1064 = vmul.f32 %v1055, %v1061
    %v1065 = vmul.f32 %v1056, %v1061
    %v1066 = vmul.f32 %v1057, %v1061
    %v1067 = vmul.f32 %v1058, %v1061
    %v1068 = vmul.f32 %v1059, %v1061
    %v1069 = vmul.f32 %v1060, %v1061
    %v1070 = vadd.f32 %v1010, %v1062
    %v1071 = vadd.f32 %v1011, %v1063
    %v1072 = vadd.f32 %v1012, %v1064
    %v1073 = vadd.f32 %v1013, %v1065
    %v1074 = vadd.f32 %v1014, %v1066
    %v1075 = vadd.f32 %v1015, %v1067
    %v1076 = vadd.f32 %v1016, %v1068
    %v1077 = vadd.f32 %v1017, %v1069
    %v1078 = vstv %s101
    %v1079 = vadd.f32 %v1070, %v1078
    %v1080 = vadd.f32 %v1071, %v1078
    %v1081 = vadd.f32 %v1072, %v1078
    %v1082 = vadd.f32 %v1073, %v1078
    %v1083 = vadd.f32 %v1074, %v1078
    %v1084 = vadd.f32 %v1075, %v1078
    %v1085 = vadd.f32 %v1076, %v1078
    %v1086 = vadd.f32 %v1077, %v1078
    %v1087 = vxor.u32 %v1079, 2147483648
    %v1088 = vxor.u32 %v1080, 2147483648
    %v1089 = vxor.u32 %v1081, 2147483648
    %v1090 = vxor.u32 %v1082, 2147483648
    %v1091 = vxor.u32 %v1083, 2147483648
    %v1092 = vxor.u32 %v1084, 2147483648
    %v1093 = vxor.u32 %v1085, 2147483648
    %v1094 = vxor.u32 %v1086, 2147483648
    %v1095 = vmul.f32 %v1087, 1.442695
    %v1096 = vpow.pop %v1095
    %v1097 = vmul.f32 %v1088, 1.442695
    %v1098 = vpow.pop %v1097
    %v1099 = vmul.f32 %v1089, 1.442695
    %v1100 = vpow.pop %v1099
    %v1101 = vmul.f32 %v1090, 1.442695
    %v1102 = vpow.pop %v1101
    %v1103 = vmul.f32 %v1091, 1.442695
    %v1104 = vpow.pop %v1103
    %v1105 = vmul.f32 %v1092, 1.442695
    %v1106 = vpow.pop %v1105
    %v1107 = vmul.f32 %v1093, 1.442695
    %v1108 = vpow.pop %v1107
    %v1109 = vmul.f32 %v1094, 1.442695
    %v1110 = vpow.pop %v1109
    %v1111 = vadd.f32 %v1096, 1.0
    %v1112 = vadd.f32 %v1098, 1.0
    %v1113 = vadd.f32 %v1100, 1.0
    %v1114 = vadd.f32 %v1102, 1.0
    %v1115 = vadd.f32 %v1104, 1.0
    %v1116 = vadd.f32 %v1106, 1.0
    %v1117 = vadd.f32 %v1108, 1.0
    %v1118 = vadd.f32 %v1110, 1.0
    %v1119 = vrcp.pop %v1111
    %v1120 = vmul.f32 1.0, %v1119
    %v1121 = vrcp.pop %v1112
    %v1122 = vmul.f32 1.0, %v1121
    %v1123 = vrcp.pop %v1113
    %v1124 = vmul.f32 1.0, %v1123
    %v1125 = vrcp.pop %v1114
    %v1126 = vmul.f32 1.0, %v1125
    %v1127 = vrcp.pop %v1115
    %v1128 = vmul.f32 1.0, %v1127
    %v1129 = vrcp.pop %v1116
    %v1130 = vmul.f32 1.0, %v1129
    %v1131 = vrcp.pop %v1117
    %v1132 = vmul.f32 1.0, %v1131
    %v1133 = vrcp.pop %v1118
    %v1134 = vmul.f32 1.0, %v1133
    %1135 = vst [vmem:[#allocation7] sm:$0xff] %v1120
    %1136 = vst [vmem:[#allocation7 + $0x8] sm:$0xff] %v1122
    %1137 = vst [vmem:[#allocation7 + $0x10] sm:$0xff] %v1124
    %1138 = vst [vmem:[#allocation7 + $0x18] sm:$0xff] %v1126
    %1139 = vst [vmem:[#allocation7 + $0x20] sm:$0xff] %v1128
    %1140 = vst [vmem:[#allocation7 + $0x28] sm:$0xff] %v1130
    %1141 = vst [vmem:[#allocation7 + $0x30] sm:$0xff] %v1132
    %1142 = vst [vmem:[#allocation7 + $0x38] sm:$0xff] %v1134
    // Predicated region
    $region18: #{tpu_custom_call.1} parent=1 // pred_check
      _
    $region19: #{tpu_custom_call.1} parent=1 // pred_check_branch
      %1144 = sbr.rel (0) target = $region21
    $region20: #{tpu_custom_call.1} parent=1 // pred_region
      %s1146 = ssub.s32 1024, 1024
      %1147 = vsyncadd [#allocation4], %s1146
      %s1149 = sshll.u32 [#allocation7], 4
      %s1150 = int_to_ptr.vmem [resolvable:$true] %s1149
      %1152 = dma.vmem_to_hbm [thread:$0]  %s1150, 1024, %s2, [#allocation4]
    $region21: #{tpu_custom_call.1} parent=1 // pred_fallthru
      _
    // Predicated region
    $region22: #{tpu_custom_call.1} parent=1 // pred_check
      _
    $region23: #{tpu_custom_call.1} parent=1 // pred_check_branch
      %1154 = sbr.rel (0) target = $region25
    $region24: #{tpu_custom_call.1} parent=1 // pred_region
      %1155 = dma.done [#allocation4], 1024
    $region25: #{tpu_custom_call.1} parent=1 // pred_fallthru
      _
    %1156 = vsyncpa [#allocation3], 1
    %1157 = vsyncpa [#allocation4], 1
    %1158 = vsyncpa [#allocation5], 1

</llo_original>
